<compile_context>
chip_gen: v6e
topology: v6e:2x2x1
jax: 0.10.0
libtpu: 0.0.40
codegen_flags: <defaults>
</compile_context>

<pallas_src>
import functools

import jax
import jax.numpy as jnp
from jax.experimental import pallas as pl
from jax.experimental.pallas import tpu as pltpu


def _bilstm_tagger_kernel(x_ref, w_in_ref, b_in_ref, w_hh_ref, w_out_ref,
                          b_out_ref, out_ref, *, seq_len, hidden_dim):
    S = seq_len
    H = hidden_dim
    H2 = 2 * H          # stacked (fwd|bwd) width

    # ---- hoisted input projection (+ folded biases) for all steps/directions:
    # one (S, 2E)bf16 @ (2E, 8H)bf16 MXU matmul, f32 accumulate.
    gin = (jnp.dot(x_ref[...], w_in_ref[...],
                   preferred_element_type=jnp.float32)
           + b_in_ref[...])                                        # (S, 8H) f32

    w_hh = w_hh_ref[...]                                           # (2H, 8H) bf16

    h2 = jnp.zeros((1, H2), jnp.float32)    # [h_fwd | h_bwd]
    c2 = jnp.zeros((1, H2), jnp.float32)    # [c_fwd | c_bwd]
    fwd_rows = []
    bwd_rows = []

    # ---- fully unrolled interleaved recurrence (S is compile-time).
    # Step t advances the forward cell at time t and the backward cell at time
    # S-1-t with a single 256-lane gate row.
    # TODO(synk): on v6e/v7x the 64x256 bf16 w_hh fits one MXU tile; holding it
    # resident via pltpu.matmul_push_rhs / matmul_acc_lhs would shave per-step
    # weight-load latency — kept as portable jnp.dot here.
    for t in range(S):
        gates = gin[t:t + 1, :] + jnp.dot(h2.astype(jnp.bfloat16), w_hh,
                                          preferred_element_type=jnp.float32)
        # Column layout [i_f,i_b,f_f,f_b,o_f,o_b,g_f,g_b]:
        #   sigmoid on lanes [0, 6H)  (expressed via native tanh),
        #   tanh    on lanes [6H, 8H) (the g gate).
        sig = 0.5 * (jnp.tanh(0.5 * gates[:, 0:3 * H2]) + 1.0)
        g2 = jnp.tanh(gates[:, 3 * H2:4 * H2])
        i2 = sig[:, 0:H2]
        f2 = sig[:, H2:2 * H2]
        o2 = sig[:, 2 * H2:3 * H2]
        c2 = f2 * c2 + i2 * g2
        h2 = o2 * jnp.tanh(c2)
        fwd_rows.append(h2[:, 0:H])          # forward hidden, time t
        bwd_rows.append(h2[:, H:H2])         # backward hidden, time S-1-t

    # ---- epilogue (all in vregs, no VMEM scratch, no flip matmul):
    # un-reverse the backward direction at collection time, assemble (S, 2H),
    # one fused hidden2tag matmul, log_softmax in f32.
    fwd = jnp.concatenate(fwd_rows, axis=0)                        # (S, H)
    bwd = jnp.concatenate(bwd_rows[::-1], axis=0)                  # (S, H)
    hidden = jnp.concatenate([fwd, bwd], axis=1)                   # (S, 2H)

    tag_space = (jnp.dot(hidden.astype(jnp.bfloat16), w_out_ref[...],
                         preferred_element_type=jnp.float32)
                 + b_out_ref[...])                                 # (S, T)

    m = jnp.max(tag_space, axis=-1, keepdims=True)
    shifted = tag_space - m
    lse = jnp.log(jnp.sum(jnp.exp(shifted), axis=-1, keepdims=True))
    out_ref[...] = shifted - lse


# ----------------------------------------------------------------------------
# Host-side weight packing (layout plumbing, done ONCE at init)
# ----------------------------------------------------------------------------
# PyTorch gate order along the 4H axis is (i, f, g, o); new pair order along
# the 8H axis is (i, f, o, g) so the tanh block ends up as one trailing slice.
_GATE_PERM = (0, 1, 3, 2)   # src block (i,f,g,o) -> dst pair index


def _pack_gate_cols(w, direction, hidden_dim):
    """Scatter the (rows, 4H) gate blocks of one direction into the interleaved
    (rows, 8H) column layout [i_f,i_b,f_f,f_b,o_f,o_b,g_f,g_b]."""
    H = hidden_dim
    rows = w.shape[0]
    out = jnp.zeros((rows, 8 * H), w.dtype)
    for src_g, dst_g in enumerate(_GATE_PERM):
        c0 = (2 * dst_g + direction) * H
        out = out.at[:, c0:c0 + H].set(w[:, src_g * H:(src_g + 1) * H])
    return out


def pack_params(params):
    """Run once at init: pack/reorder weights and cast MXU operands to bf16."""
    H = params["hidden_dim"]
    # rows 0:E multiply forward-time embeddings, rows E:2E the reversed ones.
    w_in = jnp.concatenate([_pack_gate_cols(params["w_ih_f"], 0, H),
                            _pack_gate_cols(params["w_ih_b"], 1, H)], axis=0)
    # block-diagonal recurrent weight: rows 0:H <- h_fwd, rows H:2H <- h_bwd.
    w_hh = jnp.concatenate([_pack_gate_cols(params["w_hh_f"], 0, H),
                            _pack_gate_cols(params["w_hh_b"], 1, H)], axis=0)
    b_in = (_pack_gate_cols(params["b_f"], 0, H)
            + _pack_gate_cols(params["b_b"], 1, H))
    return {
        "hidden_dim": H,
        "tagset_size": params["w_out"].shape[1],
        "embedding": params["embedding"].astype(jnp.float32),
        "w_in": w_in.astype(jnp.bfloat16),
        "w_hh": w_hh.astype(jnp.bfloat16),
        "b_in": b_in.astype(jnp.float32),
        "w_out": params["w_out"].astype(jnp.bfloat16),
        "b_out": params["b_out"].astype(jnp.float32),
    }


def lstm_tagger_forward(sentence, packed):
    """Forward pass matching LSTMTagger.forward (batch == 1, zero init hidden)."""
    # Embedding lookup: plain-JAX gather (no clean Pallas win at this size).
    embeds = jnp.take(packed["embedding"], sentence, axis=0)       # (S, E)
    S = embeds.shape[0]
    H = packed["hidden_dim"]
    T = packed["tagset_size"]

    # Forward-time and reverse-time embeddings side by side -> one fused input
    # projection for both directions inside the kernel.
    x = jnp.concatenate([embeds, embeds[::-1]], axis=1).astype(jnp.bfloat16)

    kernel = functools.partial(_bilstm_tagger_kernel, seq_len=S, hidden_dim=H)
    vmem = pl.BlockSpec(memory_space=pltpu.MemorySpace.VMEM)

    return pl.pallas_call(
        kernel,
        out_shape=jax.ShapeDtypeStruct((S, T), jnp.float32),
        in_specs=[vmem] * 6,
        out_specs=vmem,
    )(x, packed["w_in"], packed["b_in"], packed["w_hh"],
      packed["w_out"], packed["b_out"])


# ----------------------------------------------------------------------------
# Pure-JAX reference (PyTorch semantics) for correctness checking
# ----------------------------------------------------------------------------
def lstm_tagger_reference(sentence, params):
    embeds = jnp.take(params["embedding"], sentence, axis=0)
    H = params["hidden_dim"]

    def run_dir(xs, w_ih, w_hh, b):
        def step(carry, x_t):
            h, c = carry
            gates = x_t @ w_ih + h @ w_hh + b[0]
            i = jax.nn.sigmoid(gates[0:H])
            f = jax.nn.sigmoid(gates[H:2 * H])
            g = jnp.tanh(gates[2 * H:3 * H])
            o = jax.nn.sigmoid(gates[3 * H:4 * H])
            c = f * c + i * g
            h = o * jnp.tanh(c)
            return (h, c), h
        init = (jnp.zeros(H, jnp.float32), jnp.zeros(H, jnp.float32))
        _, hs = jax.lax.scan(step, init, xs)
        return hs

    fwd = run_dir(embeds, params["w_ih_f"], params["w_hh_f"], params["b_f"])
    bwd = run_dir(embeds[::-1], params["w_ih_b"], params["w_hh_b"],
                  params["b_b"])[::-1]
    lstm_out = jnp.concatenate([fwd, bwd], axis=1)
    tag_space = lstm_out @ params["w_out"] + params["b_out"]
    return jax.nn.log_softmax(tag_space, axis=1)


def init_params(key, vocab_size, embedding_dim, hidden_dim, tagset_size):
    """Deterministic synthetic parameters with the same shapes as the PyTorch module."""
    ks = jax.random.split(key, 12)
    E, H, T = embedding_dim, hidden_dim, tagset_size
    scale = 1.0 / jnp.sqrt(H)
    u = lambda k, shape: jax.random.uniform(k, shape, jnp.float32, -scale, scale)
    return {
        "hidden_dim": H,
        "embedding": jax.random.normal(ks[0], (vocab_size, E), jnp.float32),
        # PyTorch stores (4H, in); we keep the transpose (in, 4H). Gate order i,f,g,o.
        "w_ih_f": u(ks[1], (E, 4 * H)),
        "w_hh_f": u(ks[2], (H, 4 * H)),
        "b_f":    u(ks[3], (1, 4 * H)) + u(ks[4], (1, 4 * H)),   # b_ih + b_hh
        "w_ih_b": u(ks[5], (E, 4 * H)),
        "w_hh_b": u(ks[6], (H, 4 * H)),
        "b_b":    u(ks[7], (1, 4 * H)) + u(ks[8], (1, 4 * H)),
        "w_out":  u(ks[9], (2 * H, T)),
        "b_out":  u(ks[10], (1, T)),
    }


if __name__ == "__main__":
    EMBEDDING_DIM = 16
    HIDDEN_DIM = 32
    VOCAB_SIZE = 30
    TAGSET_SIZE = 8
    SEQ_LEN = 8

    key = jax.random.PRNGKey(0)
    pkey, skey = jax.random.split(key)
    params = init_params(pkey, VOCAB_SIZE, EMBEDDING_DIM, HIDDEN_DIM, TAGSET_SIZE)
    sentence = jax.random.randint(skey, (SEQ_LEN,), 0, VOCAB_SIZE, dtype=jnp.int32)

    # Pack weights ONCE (hoisted out of the forward call).
    packed = jax.tree_util.tree_map(
        lambda x: jax.block_until_ready(x) if isinstance(x, jax.Array) else x,
        pack_params(params))

    tag_scores = lstm_tagger_forward(sentence, packed)
    jax.block_until_ready(tag_scores)

    assert tag_scores.shape == (SEQ_LEN, TAGSET_SIZE)
    assert bool(jnp.all(jnp.isfinite(tag_scores)))
    # log_softmax rows should (approximately) sum to 1 in prob space.
    assert bool(jnp.allclose(jnp.sum(jnp.exp(tag_scores), axis=1), 1.0, atol=1e-4))

    # Check against a pure-JAX f32 reference of the PyTorch forward pass
    # (kernel uses bf16 MXU operands, so allow a modest tolerance).
    ref = lstm_tagger_reference(sentence, params)
    max_err = float(jnp.max(jnp.abs(tag_scores - ref)))
    assert max_err < 5e-2, f"kernel vs reference mismatch: max_err={max_err}"

    print("KERNEL_OK")
</pallas_src>

<mosaic_0001>
module attributes {stable_mosaic.version = 11 : i64} {
  func.func @_bilstm_tagger_kernel(%arg0: memref<8x32xbf16, #tpu.memory_space<vmem>>, %arg1: memref<32x256xbf16, #tpu.memory_space<vmem>>, %arg2: memref<1x256xf32, #tpu.memory_space<vmem>>, %arg3: memref<64x256xbf16, #tpu.memory_space<vmem>>, %arg4: memref<64x8xbf16, #tpu.memory_space<vmem>>, %arg5: memref<1x8xf32, #tpu.memory_space<vmem>>, %arg6: memref<8x8xf32, #tpu.memory_space<vmem>>) attributes {dimension_semantics = [], scalar_prefetch = 0 : i64, scratch_operands = 0 : i64, tpu.core_type = #tpu.core_type<tc>} {
    %c0 = arith.constant 0 : index
    %c0_0 = arith.constant 0 : index
    %0 = vector.load %arg0[%c0, %c0_0] : memref<8x32xbf16, #tpu.memory_space<vmem>>, vector<8x32xbf16>
    %c0_1 = arith.constant 0 : index
    %c0_2 = arith.constant 0 : index
    %1 = vector.load %arg1[%c0_1, %c0_2] : memref<32x256xbf16, #tpu.memory_space<vmem>>, vector<32x256xbf16>
    %cst = arith.constant dense<0.000000e+00> : vector<8x256xf32>
    %2 = tpu.matmul %0, %1, %cst {dimension_numbers = #tpu.dot_dimension_numbers<[1], [0], [0], [1], [0, 0, 1, 1], [], []>} : vector<8x32xbf16>, vector<32x256xbf16>, vector<8x256xf32> -> vector<8x256xf32>
    %c0_3 = arith.constant 0 : index
    %c0_4 = arith.constant 0 : index
    %3 = vector.load %arg2[%c0_3, %c0_4] : memref<1x256xf32, #tpu.memory_space<vmem>>, vector<1x256xf32>
    %4 = vector.broadcast %3 : vector<1x256xf32> to vector<8x256xf32>
    %5 = arith.addf %2, %4 : vector<8x256xf32>
    %c0_5 = arith.constant 0 : index
    %c0_6 = arith.constant 0 : index
    %6 = vector.load %arg3[%c0_5, %c0_6] : memref<64x256xbf16, #tpu.memory_space<vmem>>, vector<64x256xbf16>
    %cst_7 = arith.constant 0.000000e+00 : f32
    %7 = vector.broadcast %cst_7 : f32 to vector<1x64xf32>
    %cst_8 = arith.constant 0.000000e+00 : f32
    %8 = vector.broadcast %cst_8 : f32 to vector<1x64xf32>
    %9 = vector.extract_strided_slice %5 {offsets = [0, 0], sizes = [1, 256], strides = [1, 1]} : vector<8x256xf32> to vector<1x256xf32>
    %10 = arith.truncf %7 : vector<1x64xf32> to vector<1x64xbf16>
    %cst_9 = arith.constant dense<0.000000e+00> : vector<1x256xf32>
    %11 = tpu.matmul %10, %6, %cst_9 {dimension_numbers = #tpu.dot_dimension_numbers<[1], [0], [0], [1], [0, 0, 1, 1], [], []>} : vector<1x64xbf16>, vector<64x256xbf16>, vector<1x256xf32> -> vector<1x256xf32>
    %12 = arith.addf %9, %11 : vector<1x256xf32>
    %13 = vector.extract_strided_slice %12 {offsets = [0, 0], sizes = [1, 192], strides = [1, 1]} : vector<1x256xf32> to vector<1x192xf32>
    %cst_10 = arith.constant 5.000000e-01 : f32
    %14 = vector.broadcast %cst_10 : f32 to vector<1x192xf32>
    %15 = arith.mulf %14, %13 : vector<1x192xf32>
    %16 = math.tanh %15 : vector<1x192xf32>
    %cst_11 = arith.constant 1.000000e+00 : f32
    %17 = vector.broadcast %cst_11 : f32 to vector<1x192xf32>
    %18 = arith.addf %16, %17 : vector<1x192xf32>
    %cst_12 = arith.constant 5.000000e-01 : f32
    %19 = vector.broadcast %cst_12 : f32 to vector<1x192xf32>
    %20 = arith.mulf %19, %18 : vector<1x192xf32>
    %21 = vector.extract_strided_slice %12 {offsets = [0, 192], sizes = [1, 64], strides = [1, 1]} : vector<1x256xf32> to vector<1x64xf32>
    %22 = math.tanh %21 : vector<1x64xf32>
    %23 = vector.extract_strided_slice %20 {offsets = [0, 0], sizes = [1, 64], strides = [1, 1]} : vector<1x192xf32> to vector<1x64xf32>
    %24 = vector.extract_strided_slice %20 {offsets = [0, 64], sizes = [1, 64], strides = [1, 1]} : vector<1x192xf32> to vector<1x64xf32>
    %25 = vector.extract_strided_slice %20 {offsets = [0, 128], sizes = [1, 64], strides = [1, 1]} : vector<1x192xf32> to vector<1x64xf32>
    %26 = arith.mulf %24, %8 : vector<1x64xf32>
    %27 = arith.mulf %23, %22 : vector<1x64xf32>
    %28 = arith.addf %26, %27 : vector<1x64xf32>
    %29 = math.tanh %28 : vector<1x64xf32>
    %30 = arith.mulf %25, %29 : vector<1x64xf32>
    %31 = vector.extract_strided_slice %30 {offsets = [0, 0], sizes = [1, 32], strides = [1, 1]} : vector<1x64xf32> to vector<1x32xf32>
    %32 = vector.extract_strided_slice %30 {offsets = [0, 32], sizes = [1, 32], strides = [1, 1]} : vector<1x64xf32> to vector<1x32xf32>
    %33 = vector.extract_strided_slice %5 {offsets = [1, 0], sizes = [1, 256], strides = [1, 1]} : vector<8x256xf32> to vector<1x256xf32>
    %34 = arith.truncf %30 : vector<1x64xf32> to vector<1x64xbf16>
    %cst_13 = arith.constant dense<0.000000e+00> : vector<1x256xf32>
    %35 = tpu.matmul %34, %6, %cst_13 {dimension_numbers = #tpu.dot_dimension_numbers<[1], [0], [0], [1], [0, 0, 1, 1], [], []>} : vector<1x64xbf16>, vector<64x256xbf16>, vector<1x256xf32> -> vector<1x256xf32>
    %36 = arith.addf %33, %35 : vector<1x256xf32>
    %37 = vector.extract_strided_slice %36 {offsets = [0, 0], sizes = [1, 192], strides = [1, 1]} : vector<1x256xf32> to vector<1x192xf32>
    %cst_14 = arith.constant 5.000000e-01 : f32
    %38 = vector.broadcast %cst_14 : f32 to vector<1x192xf32>
    %39 = arith.mulf %38, %37 : vector<1x192xf32>
    %40 = math.tanh %39 : vector<1x192xf32>
    %cst_15 = arith.constant 1.000000e+00 : f32
    %41 = vector.broadcast %cst_15 : f32 to vector<1x192xf32>
    %42 = arith.addf %40, %41 : vector<1x192xf32>
    %cst_16 = arith.constant 5.000000e-01 : f32
    %43 = vector.broadcast %cst_16 : f32 to vector<1x192xf32>
    %44 = arith.mulf %43, %42 : vector<1x192xf32>
    %45 = vector.extract_strided_slice %36 {offsets = [0, 192], sizes = [1, 64], strides = [1, 1]} : vector<1x256xf32> to vector<1x64xf32>
    %46 = math.tanh %45 : vector<1x64xf32>
    %47 = vector.extract_strided_slice %44 {offsets = [0, 0], sizes = [1, 64], strides = [1, 1]} : vector<1x192xf32> to vector<1x64xf32>
    %48 = vector.extract_strided_slice %44 {offsets = [0, 64], sizes = [1, 64], strides = [1, 1]} : vector<1x192xf32> to vector<1x64xf32>
    %49 = vector.extract_strided_slice %44 {offsets = [0, 128], sizes = [1, 64], strides = [1, 1]} : vector<1x192xf32> to vector<1x64xf32>
    %50 = arith.mulf %48, %28 : vector<1x64xf32>
    %51 = arith.mulf %47, %46 : vector<1x64xf32>
    %52 = arith.addf %50, %51 : vector<1x64xf32>
    %53 = math.tanh %52 : vector<1x64xf32>
    %54 = arith.mulf %49, %53 : vector<1x64xf32>
    %55 = vector.extract_strided_slice %54 {offsets = [0, 0], sizes = [1, 32], strides = [1, 1]} : vector<1x64xf32> to vector<1x32xf32>
    %56 = vector.extract_strided_slice %54 {offsets = [0, 32], sizes = [1, 32], strides = [1, 1]} : vector<1x64xf32> to vector<1x32xf32>
    %57 = vector.extract_strided_slice %5 {offsets = [2, 0], sizes = [1, 256], strides = [1, 1]} : vector<8x256xf32> to vector<1x256xf32>
    %58 = arith.truncf %54 : vector<1x64xf32> to vector<1x64xbf16>
    %cst_17 = arith.constant dense<0.000000e+00> : vector<1x256xf32>
    %59 = tpu.matmul %58, %6, %cst_17 {dimension_numbers = #tpu.dot_dimension_numbers<[1], [0], [0], [1], [0, 0, 1, 1], [], []>} : vector<1x64xbf16>, vector<64x256xbf16>, vector<1x256xf32> -> vector<1x256xf32>
    %60 = arith.addf %57, %59 : vector<1x256xf32>
    %61 = vector.extract_strided_slice %60 {offsets = [0, 0], sizes = [1, 192], strides = [1, 1]} : vector<1x256xf32> to vector<1x192xf32>
    %cst_18 = arith.constant 5.000000e-01 : f32
    %62 = vector.broadcast %cst_18 : f32 to vector<1x192xf32>
    %63 = arith.mulf %62, %61 : vector<1x192xf32>
    %64 = math.tanh %63 : vector<1x192xf32>
    %cst_19 = arith.constant 1.000000e+00 : f32
    %65 = vector.broadcast %cst_19 : f32 to vector<1x192xf32>
    %66 = arith.addf %64, %65 : vector<1x192xf32>
    %cst_20 = arith.constant 5.000000e-01 : f32
    %67 = vector.broadcast %cst_20 : f32 to vector<1x192xf32>
    %68 = arith.mulf %67, %66 : vector<1x192xf32>
    %69 = vector.extract_strided_slice %60 {offsets = [0, 192], sizes = [1, 64], strides = [1, 1]} : vector<1x256xf32> to vector<1x64xf32>
    %70 = math.tanh %69 : vector<1x64xf32>
    %71 = vector.extract_strided_slice %68 {offsets = [0, 0], sizes = [1, 64], strides = [1, 1]} : vector<1x192xf32> to vector<1x64xf32>
    %72 = vector.extract_strided_slice %68 {offsets = [0, 64], sizes = [1, 64], strides = [1, 1]} : vector<1x192xf32> to vector<1x64xf32>
    %73 = vector.extract_strided_slice %68 {offsets = [0, 128], sizes = [1, 64], strides = [1, 1]} : vector<1x192xf32> to vector<1x64xf32>
    %74 = arith.mulf %72, %52 : vector<1x64xf32>
    %75 = arith.mulf %71, %70 : vector<1x64xf32>
    %76 = arith.addf %74, %75 : vector<1x64xf32>
    %77 = math.tanh %76 : vector<1x64xf32>
    %78 = arith.mulf %73, %77 : vector<1x64xf32>
    %79 = vector.extract_strided_slice %78 {offsets = [0, 0], sizes = [1, 32], strides = [1, 1]} : vector<1x64xf32> to vector<1x32xf32>
    %80 = vector.extract_strided_slice %78 {offsets = [0, 32], sizes = [1, 32], strides = [1, 1]} : vector<1x64xf32> to vector<1x32xf32>
    %81 = vector.extract_strided_slice %5 {offsets = [3, 0], sizes = [1, 256], strides = [1, 1]} : vector<8x256xf32> to vector<1x256xf32>
    %82 = arith.truncf %78 : vector<1x64xf32> to vector<1x64xbf16>
    %cst_21 = arith.constant dense<0.000000e+00> : vector<1x256xf32>
    %83 = tpu.matmul %82, %6, %cst_21 {dimension_numbers = #tpu.dot_dimension_numbers<[1], [0], [0], [1], [0, 0, 1, 1], [], []>} : vector<1x64xbf16>, vector<64x256xbf16>, vector<1x256xf32> -> vector<1x256xf32>
    %84 = arith.addf %81, %83 : vector<1x256xf32>
    %85 = vector.extract_strided_slice %84 {offsets = [0, 0], sizes = [1, 192], strides = [1, 1]} : vector<1x256xf32> to vector<1x192xf32>
    %cst_22 = arith.constant 5.000000e-01 : f32
    %86 = vector.broadcast %cst_22 : f32 to vector<1x192xf32>
    %87 = arith.mulf %86, %85 : vector<1x192xf32>
    %88 = math.tanh %87 : vector<1x192xf32>
    %cst_23 = arith.constant 1.000000e+00 : f32
    %89 = vector.broadcast %cst_23 : f32 to vector<1x192xf32>
    %90 = arith.addf %88, %89 : vector<1x192xf32>
    %cst_24 = arith.constant 5.000000e-01 : f32
    %91 = vector.broadcast %cst_24 : f32 to vector<1x192xf32>
    %92 = arith.mulf %91, %90 : vector<1x192xf32>
    %93 = vector.extract_strided_slice %84 {offsets = [0, 192], sizes = [1, 64], strides = [1, 1]} : vector<1x256xf32> to vector<1x64xf32>
    %94 = math.tanh %93 : vector<1x64xf32>
    %95 = vector.extract_strided_slice %92 {offsets = [0, 0], sizes = [1, 64], strides = [1, 1]} : vector<1x192xf32> to vector<1x64xf32>
    %96 = vector.extract_strided_slice %92 {offsets = [0, 64], sizes = [1, 64], strides = [1, 1]} : vector<1x192xf32> to vector<1x64xf32>
    %97 = vector.extract_strided_slice %92 {offsets = [0, 128], sizes = [1, 64], strides = [1, 1]} : vector<1x192xf32> to vector<1x64xf32>
    %98 = arith.mulf %96, %76 : vector<1x64xf32>
    %99 = arith.mulf %95, %94 : vector<1x64xf32>
    %100 = arith.addf %98, %99 : vector<1x64xf32>
    %101 = math.tanh %100 : vector<1x64xf32>
    %102 = arith.mulf %97, %101 : vector<1x64xf32>
    %103 = vector.extract_strided_slice %102 {offsets = [0, 0], sizes = [1, 32], strides = [1, 1]} : vector<1x64xf32> to vector<1x32xf32>
    %104 = vector.extract_strided_slice %102 {offsets = [0, 32], sizes = [1, 32], strides = [1, 1]} : vector<1x64xf32> to vector<1x32xf32>
    %105 = vector.extract_strided_slice %5 {offsets = [4, 0], sizes = [1, 256], strides = [1, 1]} : vector<8x256xf32> to vector<1x256xf32>
    %106 = arith.truncf %102 : vector<1x64xf32> to vector<1x64xbf16>
    %cst_25 = arith.constant dense<0.000000e+00> : vector<1x256xf32>
    %107 = tpu.matmul %106, %6, %cst_25 {dimension_numbers = #tpu.dot_dimension_numbers<[1], [0], [0], [1], [0, 0, 1, 1], [], []>} : vector<1x64xbf16>, vector<64x256xbf16>, vector<1x256xf32> -> vector<1x256xf32>
    %108 = arith.addf %105, %107 : vector<1x256xf32>
    %109 = vector.extract_strided_slice %108 {offsets = [0, 0], sizes = [1, 192], strides = [1, 1]} : vector<1x256xf32> to vector<1x192xf32>
    %cst_26 = arith.constant 5.000000e-01 : f32
    %110 = vector.broadcast %cst_26 : f32 to vector<1x192xf32>
    %111 = arith.mulf %110, %109 : vector<1x192xf32>
    %112 = math.tanh %111 : vector<1x192xf32>
    %cst_27 = arith.constant 1.000000e+00 : f32
    %113 = vector.broadcast %cst_27 : f32 to vector<1x192xf32>
    %114 = arith.addf %112, %113 : vector<1x192xf32>
    %cst_28 = arith.constant 5.000000e-01 : f32
    %115 = vector.broadcast %cst_28 : f32 to vector<1x192xf32>
    %116 = arith.mulf %115, %114 : vector<1x192xf32>
    %117 = vector.extract_strided_slice %108 {offsets = [0, 192], sizes = [1, 64], strides = [1, 1]} : vector<1x256xf32> to vector<1x64xf32>
    %118 = math.tanh %117 : vector<1x64xf32>
    %119 = vector.extract_strided_slice %116 {offsets = [0, 0], sizes = [1, 64], strides = [1, 1]} : vector<1x192xf32> to vector<1x64xf32>
    %120 = vector.extract_strided_slice %116 {offsets = [0, 64], sizes = [1, 64], strides = [1, 1]} : vector<1x192xf32> to vector<1x64xf32>
    %121 = vector.extract_strided_slice %116 {offsets = [0, 128], sizes = [1, 64], strides = [1, 1]} : vector<1x192xf32> to vector<1x64xf32>
    %122 = arith.mulf %120, %100 : vector<1x64xf32>
    %123 = arith.mulf %119, %118 : vector<1x64xf32>
    %124 = arith.addf %122, %123 : vector<1x64xf32>
    %125 = math.tanh %124 : vector<1x64xf32>
    %126 = arith.mulf %121, %125 : vector<1x64xf32>
    %127 = vector.extract_strided_slice %126 {offsets = [0, 0], sizes = [1, 32], strides = [1, 1]} : vector<1x64xf32> to vector<1x32xf32>
    %128 = vector.extract_strided_slice %126 {offsets = [0, 32], sizes = [1, 32], strides = [1, 1]} : vector<1x64xf32> to vector<1x32xf32>
    %129 = vector.extract_strided_slice %5 {offsets = [5, 0], sizes = [1, 256], strides = [1, 1]} : vector<8x256xf32> to vector<1x256xf32>
    %130 = arith.truncf %126 : vector<1x64xf32> to vector<1x64xbf16>
    %cst_29 = arith.constant dense<0.000000e+00> : vector<1x256xf32>
    %131 = tpu.matmul %130, %6, %cst_29 {dimension_numbers = #tpu.dot_dimension_numbers<[1], [0], [0], [1], [0, 0, 1, 1], [], []>} : vector<1x64xbf16>, vector<64x256xbf16>, vector<1x256xf32> -> vector<1x256xf32>
    %132 = arith.addf %129, %131 : vector<1x256xf32>
    %133 = vector.extract_strided_slice %132 {offsets = [0, 0], sizes = [1, 192], strides = [1, 1]} : vector<1x256xf32> to vector<1x192xf32>
    %cst_30 = arith.constant 5.000000e-01 : f32
    %134 = vector.broadcast %cst_30 : f32 to vector<1x192xf32>
    %135 = arith.mulf %134, %133 : vector<1x192xf32>
    %136 = math.tanh %135 : vector<1x192xf32>
    %cst_31 = arith.constant 1.000000e+00 : f32
    %137 = vector.broadcast %cst_31 : f32 to vector<1x192xf32>
    %138 = arith.addf %136, %137 : vector<1x192xf32>
    %cst_32 = arith.constant 5.000000e-01 : f32
    %139 = vector.broadcast %cst_32 : f32 to vector<1x192xf32>
    %140 = arith.mulf %139, %138 : vector<1x192xf32>
    %141 = vector.extract_strided_slice %132 {offsets = [0, 192], sizes = [1, 64], strides = [1, 1]} : vector<1x256xf32> to vector<1x64xf32>
    %142 = math.tanh %141 : vector<1x64xf32>
    %143 = vector.extract_strided_slice %140 {offsets = [0, 0], sizes = [1, 64], strides = [1, 1]} : vector<1x192xf32> to vector<1x64xf32>
    %144 = vector.extract_strided_slice %140 {offsets = [0, 64], sizes = [1, 64], strides = [1, 1]} : vector<1x192xf32> to vector<1x64xf32>
    %145 = vector.extract_strided_slice %140 {offsets = [0, 128], sizes = [1, 64], strides = [1, 1]} : vector<1x192xf32> to vector<1x64xf32>
    %146 = arith.mulf %144, %124 : vector<1x64xf32>
    %147 = arith.mulf %143, %142 : vector<1x64xf32>
    %148 = arith.addf %146, %147 : vector<1x64xf32>
    %149 = math.tanh %148 : vector<1x64xf32>
    %150 = arith.mulf %145, %149 : vector<1x64xf32>
    %151 = vector.extract_strided_slice %150 {offsets = [0, 0], sizes = [1, 32], strides = [1, 1]} : vector<1x64xf32> to vector<1x32xf32>
    %152 = vector.extract_strided_slice %150 {offsets = [0, 32], sizes = [1, 32], strides = [1, 1]} : vector<1x64xf32> to vector<1x32xf32>
    %153 = vector.extract_strided_slice %5 {offsets = [6, 0], sizes = [1, 256], strides = [1, 1]} : vector<8x256xf32> to vector<1x256xf32>
    %154 = arith.truncf %150 : vector<1x64xf32> to vector<1x64xbf16>
    %cst_33 = arith.constant dense<0.000000e+00> : vector<1x256xf32>
    %155 = tpu.matmul %154, %6, %cst_33 {dimension_numbers = #tpu.dot_dimension_numbers<[1], [0], [0], [1], [0, 0, 1, 1], [], []>} : vector<1x64xbf16>, vector<64x256xbf16>, vector<1x256xf32> -> vector<1x256xf32>
    %156 = arith.addf %153, %155 : vector<1x256xf32>
    %157 = vector.extract_strided_slice %156 {offsets = [0, 0], sizes = [1, 192], strides = [1, 1]} : vector<1x256xf32> to vector<1x192xf32>
    %cst_34 = arith.constant 5.000000e-01 : f32
    %158 = vector.broadcast %cst_34 : f32 to vector<1x192xf32>
    %159 = arith.mulf %158, %157 : vector<1x192xf32>
    %160 = math.tanh %159 : vector<1x192xf32>
    %cst_35 = arith.constant 1.000000e+00 : f32
    %161 = vector.broadcast %cst_35 : f32 to vector<1x192xf32>
    %162 = arith.addf %160, %161 : vector<1x192xf32>
    %cst_36 = arith.constant 5.000000e-01 : f32
    %163 = vector.broadcast %cst_36 : f32 to vector<1x192xf32>
    %164 = arith.mulf %163, %162 : vector<1x192xf32>
    %165 = vector.extract_strided_slice %156 {offsets = [0, 192], sizes = [1, 64], strides = [1, 1]} : vector<1x256xf32> to vector<1x64xf32>
    %166 = math.tanh %165 : vector<1x64xf32>
    %167 = vector.extract_strided_slice %164 {offsets = [0, 0], sizes = [1, 64], strides = [1, 1]} : vector<1x192xf32> to vector<1x64xf32>
    %168 = vector.extract_strided_slice %164 {offsets = [0, 64], sizes = [1, 64], strides = [1, 1]} : vector<1x192xf32> to vector<1x64xf32>
    %169 = vector.extract_strided_slice %164 {offsets = [0, 128], sizes = [1, 64], strides = [1, 1]} : vector<1x192xf32> to vector<1x64xf32>
    %170 = arith.mulf %168, %148 : vector<1x64xf32>
    %171 = arith.mulf %167, %166 : vector<1x64xf32>
    %172 = arith.addf %170, %171 : vector<1x64xf32>
    %173 = math.tanh %172 : vector<1x64xf32>
    %174 = arith.mulf %169, %173 : vector<1x64xf32>
    %175 = vector.extract_strided_slice %174 {offsets = [0, 0], sizes = [1, 32], strides = [1, 1]} : vector<1x64xf32> to vector<1x32xf32>
    %176 = vector.extract_strided_slice %174 {offsets = [0, 32], sizes = [1, 32], strides = [1, 1]} : vector<1x64xf32> to vector<1x32xf32>
    %177 = vector.extract_strided_slice %5 {offsets = [7, 0], sizes = [1, 256], strides = [1, 1]} : vector<8x256xf32> to vector<1x256xf32>
    %178 = arith.truncf %174 : vector<1x64xf32> to vector<1x64xbf16>
    %cst_37 = arith.constant dense<0.000000e+00> : vector<1x256xf32>
    %179 = tpu.matmul %178, %6, %cst_37 {dimension_numbers = #tpu.dot_dimension_numbers<[1], [0], [0], [1], [0, 0, 1, 1], [], []>} : vector<1x64xbf16>, vector<64x256xbf16>, vector<1x256xf32> -> vector<1x256xf32>
    %180 = arith.addf %177, %179 : vector<1x256xf32>
    %181 = vector.extract_strided_slice %180 {offsets = [0, 0], sizes = [1, 192], strides = [1, 1]} : vector<1x256xf32> to vector<1x192xf32>
    %cst_38 = arith.constant 5.000000e-01 : f32
    %182 = vector.broadcast %cst_38 : f32 to vector<1x192xf32>
    %183 = arith.mulf %182, %181 : vector<1x192xf32>
    %184 = math.tanh %183 : vector<1x192xf32>
    %cst_39 = arith.constant 1.000000e+00 : f32
    %185 = vector.broadcast %cst_39 : f32 to vector<1x192xf32>
    %186 = arith.addf %184, %185 : vector<1x192xf32>
    %cst_40 = arith.constant 5.000000e-01 : f32
    %187 = vector.broadcast %cst_40 : f32 to vector<1x192xf32>
    %188 = arith.mulf %187, %186 : vector<1x192xf32>
    %189 = vector.extract_strided_slice %180 {offsets = [0, 192], sizes = [1, 64], strides = [1, 1]} : vector<1x256xf32> to vector<1x64xf32>
    %190 = math.tanh %189 : vector<1x64xf32>
    %191 = vector.extract_strided_slice %188 {offsets = [0, 0], sizes = [1, 64], strides = [1, 1]} : vector<1x192xf32> to vector<1x64xf32>
    %192 = vector.extract_strided_slice %188 {offsets = [0, 64], sizes = [1, 64], strides = [1, 1]} : vector<1x192xf32> to vector<1x64xf32>
    %193 = vector.extract_strided_slice %188 {offsets = [0, 128], sizes = [1, 64], strides = [1, 1]} : vector<1x192xf32> to vector<1x64xf32>
    %194 = arith.mulf %192, %172 : vector<1x64xf32>
    %195 = arith.mulf %191, %190 : vector<1x64xf32>
    %196 = arith.addf %194, %195 : vector<1x64xf32>
    %197 = math.tanh %196 : vector<1x64xf32>
    %198 = arith.mulf %193, %197 : vector<1x64xf32>
    %199 = vector.extract_strided_slice %198 {offsets = [0, 0], sizes = [1, 32], strides = [1, 1]} : vector<1x64xf32> to vector<1x32xf32>
    %200 = vector.extract_strided_slice %198 {offsets = [0, 32], sizes = [1, 32], strides = [1, 1]} : vector<1x64xf32> to vector<1x32xf32>
    %201 = tpu.concatenate %31, %55, %79, %103, %127, %151, %175, %199 in 0 : vector<1x32xf32>, vector<1x32xf32>, vector<1x32xf32>, vector<1x32xf32>, vector<1x32xf32>, vector<1x32xf32>, vector<1x32xf32>, vector<1x32xf32> -> vector<8x32xf32>
    %202 = tpu.concatenate %200, %176, %152, %128, %104, %80, %56, %32 in 0 : vector<1x32xf32>, vector<1x32xf32>, vector<1x32xf32>, vector<1x32xf32>, vector<1x32xf32>, vector<1x32xf32>, vector<1x32xf32>, vector<1x32xf32> -> vector<8x32xf32>
    %203 = tpu.concatenate %201, %202 in 1 : vector<8x32xf32>, vector<8x32xf32> -> vector<8x64xf32>
    %204 = arith.truncf %203 : vector<8x64xf32> to vector<8x64xbf16>
    %c0_41 = arith.constant 0 : index
    %c0_42 = arith.constant 0 : index
    %205 = vector.load %arg4[%c0_41, %c0_42] : memref<64x8xbf16, #tpu.memory_space<vmem>>, vector<64x8xbf16>
    %cst_43 = arith.constant dense<0.000000e+00> : vector<8x8xf32>
    %206 = tpu.matmul %204, %205, %cst_43 {dimension_numbers = #tpu.dot_dimension_numbers<[1], [0], [0], [1], [0, 0, 1, 1], [], []>} : vector<8x64xbf16>, vector<64x8xbf16>, vector<8x8xf32> -> vector<8x8xf32>
    %c0_44 = arith.constant 0 : index
    %c0_45 = arith.constant 0 : index
    %207 = vector.load %arg5[%c0_44, %c0_45] : memref<1x8xf32, #tpu.memory_space<vmem>>, vector<1x8xf32>
    %208 = vector.broadcast %207 : vector<1x8xf32> to vector<8x8xf32>
    %209 = arith.addf %206, %208 : vector<8x8xf32>
    %cst_46 = arith.constant dense<0xFF800000> : vector<8xf32>
    %210 = vector.multi_reduction <maximumf>, %209, %cst_46 [1] : vector<8x8xf32> to vector<8xf32>
    %211 = vector.shape_cast %210 : vector<8xf32> to vector<8x1xf32>
    %212 = vector.broadcast %211 : vector<8x1xf32> to vector<8x8xf32>
    %213 = arith.subf %209, %212 : vector<8x8xf32>
    %214 = math.exp %213 : vector<8x8xf32>
    %cst_47 = arith.constant dense<0.000000e+00> : vector<8xf32>
    %215 = vector.multi_reduction <add>, %214, %cst_47 [1] : vector<8x8xf32> to vector<8xf32>
    %216 = vector.shape_cast %215 : vector<8xf32> to vector<8x1xf32>
    %217 = math.log %216 : vector<8x1xf32>
    %218 = vector.broadcast %217 : vector<8x1xf32> to vector<8x8xf32>
    %219 = arith.subf %213, %218 : vector<8x8xf32>
    %c0_48 = arith.constant 0 : index
    %c0_49 = arith.constant 0 : index
    %220 = vector.load %arg6[%c0_48, %c0_49] : memref<8x8xf32, #tpu.memory_space<vmem>>, vector<8x8xf32>
    tpu.vector_store %arg6[%c0_48, %c0_49], %219 {strides = array<i32>} : memref<8x8xf32, #tpu.memory_space<vmem>>, vector<8x8xf32>,
    return
  }
}

</mosaic_0001>

<llo_original>
// kernel: tpu_custom_call.1
$region0: #{tpu_custom_call.1}
  #allocation0 [shape = 'u32[]', space=smem, size = 0x4, offset = 0x4, fixed_abs, tag = 'smem constant byte address 0x4 - core index']
  #allocation1 [shape = 'u32[144,128]{1,0:T(1,128)}', space=vmem, size = 0x12000, scoped, tag = 'internal scratch']
  %s0 = inlined_call_operand.vmem [shape: bf16[8,32], index: 0, kind: input, shape index: {}]
  %s1 = inlined_call_operand.vmem [shape: bf16[32,256], index: 1, kind: input, shape index: {}]
  %s2 = inlined_call_operand.vmem [shape: f32[1,256], index: 2, kind: input, shape index: {}]
  %s3 = inlined_call_operand.hbm [shape: bf16[64,256], index: 3, kind: input, shape index: {}]
  %s4 = inlined_call_operand.vmem [shape: bf16[64,8], index: 4, kind: input, shape index: {}]
  %s5 = inlined_call_operand.vmem [shape: f32[1,8], index: 5, kind: input, shape index: {}]
  %s6 = inlined_call_operand.hbm [shape: f32[8,8], index: 6, kind: output, shape index: {}]
  %s7 = sld [smem:[#allocation0]]
  $region38: #{tpu_custom_call.1} parent=0
    _
  %s9 = ssub.s32 1, %s7
  %s10 = scalar_select 0, %s9, %s7
  $region1: #{tpu_custom_call.1} parent=0
    #allocation2 [shape = 'u8[32768]{0}', space=vmem, size = 0x8000, scoped, tag = 'input window, operand 3, single buffered']
    #allocation3 [shape = 's32[1]{0}', space=sflag, size = 0x4, scoped, tag = 'scoped memory for tpu_custom_call.1']
    #allocation4 [shape = 's32[1]{0}', space=sflag, size = 0x4, scoped, tag = 'scoped memory for tpu_custom_call.1']
    #allocation5 [shape = 'u8[4096]{0}', space=vmem, size = 0x1000, scoped, tag = 'output window, operand 0, single buffered']
    %11 = vsyncpa [#allocation3], 0
    %12 = vsyncpa [#allocation4], 0
    // Predicated region
    $region2: #{tpu_custom_call.1} parent=1 // pred_check
      _
    $region3: #{tpu_custom_call.1} parent=1 // pred_check_branch
      %14 = sbr.rel (0) target = $region5
    $region4: #{tpu_custom_call.1} parent=1 // pred_region
      _
    $region5: #{tpu_custom_call.1} parent=1 // pred_fallthru
      _
    // Predicated region
    $region6: #{tpu_custom_call.1} parent=1 // pred_check
      _
    $region7: #{tpu_custom_call.1} parent=1 // pred_check_branch
      %16 = sbr.rel (0) target = $region9
    $region8: #{tpu_custom_call.1} parent=1 // pred_region
      _
    $region9: #{tpu_custom_call.1} parent=1 // pred_fallthru
      _
    // Predicated region
    $region10: #{tpu_custom_call.1} parent=1 // pred_check
      _
    $region11: #{tpu_custom_call.1} parent=1 // pred_check_branch
      %18 = sbr.rel (0) target = $region13
    $region12: #{tpu_custom_call.1} parent=1 // pred_region
      _
    $region13: #{tpu_custom_call.1} parent=1 // pred_fallthru
      _
    // Predicated region
    $region14: #{tpu_custom_call.1} parent=1 // pred_check
      _
    $region15: #{tpu_custom_call.1} parent=1 // pred_check_branch
      %20 = sbr.rel (0) target = $region17
    $region16: #{tpu_custom_call.1} parent=1 // pred_region
      %s22 = ssub.s32 1024, 1024
      %23 = vsyncadd [#allocation3], %s22
      %s24 = sshll.u32 [#allocation2], 4
      %s25 = int_to_ptr.vmem [resolvable:$true] %s24
      %30 = dma.hbm_to_vmem [thread:$0]  %s3, 1024, %s25, [#allocation3], 128, 128, 8
    $region17: #{tpu_custom_call.1} parent=1 // pred_fallthru
      _
    // Predicated region
    $region18: #{tpu_custom_call.1} parent=1 // pred_check
      _
    $region19: #{tpu_custom_call.1} parent=1 // pred_check_branch
      %32 = sbr.rel (0) target = $region21
    $region20: #{tpu_custom_call.1} parent=1 // pred_region
      _
    $region21: #{tpu_custom_call.1} parent=1 // pred_fallthru
      _
    // Predicated region
    $region22: #{tpu_custom_call.1} parent=1 // pred_check
      _
    $region23: #{tpu_custom_call.1} parent=1 // pred_check_branch
      %34 = sbr.rel (0) target = $region25
    $region24: #{tpu_custom_call.1} parent=1 // pred_region
      _
    $region25: #{tpu_custom_call.1} parent=1 // pred_fallthru
      _
    // Predicated region
    $region26: #{tpu_custom_call.1} parent=1 // pred_check
      _
    $region27: #{tpu_custom_call.1} parent=1 // pred_check_branch
      %36 = sbr.rel (0) target = $region29
    $region28: #{tpu_custom_call.1} parent=1 // pred_region
      %37 = dma.done [#allocation3], 1024
    $region29: #{tpu_custom_call.1} parent=1 // pred_fallthru
      _
    %v39 = vld [vmem:[%s0] sm:$0xf]
    %v40 = vld [vmem:[%s1] sm:$0xff]
    %v41 = vld [vmem:[%s1 + $0x8] sm:$0xff]
    %v42 = vld [vmem:[%s1 + $0x10] sm:$0xff]
    %v43 = vld [vmem:[%s1 + $0x18] sm:$0xff]
    %v44 = vld [vmem:[%s2] sm:$0x3]
    %v46 = vlaneseq
    %v47 = vshrl.u32 %v46, 7
    %v48 = vsub.s32 0, %v47
    %v49 = vrot.slane %v44, %v48
    %v50 = vlaneseq
    %v51 = vshrl.u32 %v50, 7
    %v52 = vsub.s32 1, %v51
    %v53 = vrot.slane %v44, %v52
    %v60 = vunpack.c.l.b16 %v40
    %v61 = vunpack.c.h.b16 %v40
    %v62 = vunpack.c.l.b16 %v41
    %v63 = vunpack.c.h.b16 %v41
    %v64 = vunpack.c.l.b16 %v42
    %v65 = vunpack.c.h.b16 %v42
    %v66 = vunpack.c.l.b16 %v43
    %v67 = vunpack.c.h.b16 %v43
    %v68 = vpack.c.b16 %v62, %v60
    %v69 = vpack.c.b16 %v63, %v61
    %v70 = vpack.c.b16 %v66, %v64
    %v71 = vpack.c.b16 %v67, %v65
    %vm76 = vcmask 261120
    %v78 = vsel %vm76, %v39, 0
    %80 = vmatprep.subr.bf16.mxu0 0
    %81 = vmatpush1.bf16.msra.mxu0 0
    %82 = vmatprep.subr.bf16.mxu0 0
    %83 = vmatpush1.bf16.msra.mxu0 0
    %84 = vmatprep.subr.bf16.mxu0 0
    %85 = vmatpush1.bf16.msra.mxu0 0
    %86 = vmatprep.subr.bf16.mxu0 0
    %87 = vmatpush1.bf16.msra.mxu0 0
    %88 = vmatprep.subr.bf16.mxu0 0
    %89 = vmatpush1.bf16.msra.mxu0 0
    %90 = vmatprep.subr.bf16.mxu0 0
    %91 = vmatpush1.bf16.msra.mxu0 0
    %92 = vmatprep.subr.bf16.mxu0 %v71
    %93 = vmatpush1.bf16.msra.mxu0 %v70
    %94 = vmatprep.subr.bf16.mxu0 %v69
    %95 = vmatpush1.bf16.msra.mxu0 %v68
    %96 = vmatprep.subr.bf16.mxu0 0
    %97 = vmatpush2.bf16.msra.mxu0 0
    %98 = vmatprep.subr.bf16.mxu0 0
    %99 = vmatpush2.bf16.msra.mxu0 0
    %100 = vmatprep.subr.bf16.mxu0 0
    %101 = vmatpush2.bf16.msra.mxu0 0
    %102 = vmatprep.subr.bf16.mxu0 0
    %103 = vmatpush2.bf16.msra.mxu0 0
    %104 = vmatprep.subr.bf16.mxu0 0
    %105 = vmatpush2.bf16.msra.mxu0 0
    %106 = vmatprep.subr.bf16.mxu0 0
    %107 = vmatpush2.bf16.msra.mxu0 0
    %108 = vmatprep.subr.bf16.mxu0 0
    %109 = vmatpush2.bf16.msra.mxu0 0
    %110 = vmatprep.subr.bf16.mxu0 0
    %111 = vmatpush2.bf16.msra.mxu0 0
    %112 = vmatprep.mubr.bf16.mxu0 0
    %113 = vmatmul.mubr.bf16.gmra.mxu0 %v78
    %v114 = vpop.f32.mrf.mxu0
    %v115 = vadd.f32 %v49, %v114
    %v116 = vpop.f32.mrf.mxu0
    %v117 = vadd.f32 %v53, %v116
    %v118 = vpop.f32.mrf.mxu0
    %v119 = vpop.f32.mrf.mxu0
    %120 = vdwg.mxu0
    %v121 = vld [vmem:[#allocation2] sm:$0xff]
    %v122 = vld [vmem:[#allocation2 + $0x8] sm:$0xff]
    %v123 = vld [vmem:[#allocation2 + $0x10] sm:$0xff]
    %v124 = vld [vmem:[#allocation2 + $0x18] sm:$0xff]
    %v125 = vld [vmem:[#allocation2 + $0x20] sm:$0xff]
    %v126 = vld [vmem:[#allocation2 + $0x28] sm:$0xff]
    %v127 = vld [vmem:[#allocation2 + $0x30] sm:$0xff]
    %v128 = vld [vmem:[#allocation2 + $0x38] sm:$0xff]
    %v137 = vunpack.c.l.b16 %v121
    %v138 = vunpack.c.h.b16 %v121
    %v139 = vunpack.c.l.b16 %v122
    %v140 = vunpack.c.h.b16 %v122
    %v141 = vunpack.c.l.b16 %v123
    %v142 = vunpack.c.h.b16 %v123
    %v143 = vunpack.c.l.b16 %v124
    %v144 = vunpack.c.h.b16 %v124
    %v145 = vunpack.c.l.b16 %v125
    %v146 = vunpack.c.h.b16 %v125
    %v147 = vunpack.c.l.b16 %v126
    %v148 = vunpack.c.h.b16 %v126
    %v149 = vunpack.c.l.b16 %v127
    %v150 = vunpack.c.h.b16 %v127
    %v151 = vunpack.c.l.b16 %v128
    %v152 = vunpack.c.h.b16 %v128
    %v153 = vpack.c.b16 %v139, %v137
    %v154 = vpack.c.b16 %v140, %v138
    %v155 = vpack.c.b16 %v143, %v141
    %v156 = vpack.c.b16 %v144, %v142
    %v157 = vpack.c.b16 %v147, %v145
    %v158 = vpack.c.b16 %v148, %v146
    %v159 = vpack.c.b16 %v151, %v149
    %v160 = vpack.c.b16 %v152, %v150
    %vm169 = vcmask 523264
    %v171 = vsel %vm169, 0, 0
    %173 = vmatprep.subr.bf16.mxu0 0
    %174 = vmatpush1.bf16.msra.mxu0 0
    %175 = vmatprep.subr.bf16.mxu0 0
    %176 = vmatpush1.bf16.msra.mxu0 0
    %177 = vmatprep.subr.bf16.mxu0 0
    %178 = vmatpush1.bf16.msra.mxu0 0
    %179 = vmatprep.subr.bf16.mxu0 0
    %180 = vmatpush1.bf16.msra.mxu0 0
    %181 = vmatprep.subr.bf16.mxu0 %v160
    %182 = vmatpush1.bf16.msra.mxu0 %v159
    %183 = vmatprep.subr.bf16.mxu0 %v158
    %184 = vmatpush1.bf16.msra.mxu0 %v157
    %185 = vmatprep.subr.bf16.mxu0 %v156
    %186 = vmatpush1.bf16.msra.mxu0 %v155
    %187 = vmatprep.subr.bf16.mxu0 %v154
    %188 = vmatpush1.bf16.msra.mxu0 %v153
    %189 = vmatprep.subr.bf16.mxu0 0
    %190 = vmatpush2.bf16.msra.mxu0 0
    %191 = vmatprep.subr.bf16.mxu0 0
    %192 = vmatpush2.bf16.msra.mxu0 0
    %193 = vmatprep.subr.bf16.mxu0 0
    %194 = vmatpush2.bf16.msra.mxu0 0
    %195 = vmatprep.subr.bf16.mxu0 0
    %196 = vmatpush2.bf16.msra.mxu0 0
    %197 = vmatprep.subr.bf16.mxu0 0
    %198 = vmatpush2.bf16.msra.mxu0 0
    %199 = vmatprep.subr.bf16.mxu0 0
    %200 = vmatpush2.bf16.msra.mxu0 0
    %201 = vmatprep.subr.bf16.mxu0 0
    %202 = vmatpush2.bf16.msra.mxu0 0
    %203 = vmatprep.subr.bf16.mxu0 0
    %204 = vmatpush2.bf16.msra.mxu0 0
    %205 = vmatprep.mubr.bf16.mxu0 0
    %206 = vmatmul.mubr.bf16.gmra.mxu0 %v171
    %v207 = vpop.f32.mrf.mxu0
    %v208 = vadd.f32 0.0, %v207
    %v209 = vpop.f32.mrf.mxu0
    %v210 = vadd.f32 0.0, %v209
    %v211 = vpop.f32.mrf.mxu0
    %v212 = vpop.f32.mrf.mxu0
    %213 = vdwg.mxu0
    %v214 = vadd.f32 %v115, %v208
    %v215 = vadd.f32 %v117, %v210
    %v216 = vmul.f32 %v214, 0.5
    %v217 = vmul.f32 %v215, 0.5
    %v218 = vtanh.pop %v216
    %v219 = vtanh.pop %v217
    %v220 = vadd.f32 %v218, 1.0
    %v221 = vadd.f32 %v219, 1.0
    %v222 = vmul.f32 %v220, 0.5
    %v223 = vmul.f32 %v221, 0.5
    %v224 = vtanh.pop %v215
    %v225 = vmul.f32 %v222, 0.0
    %227 = vrot.lane.b32.xlu0 %v224, 64
    %v228 = vpop.permute.xlu0 %227
    %v230 = vmul.f32 %v222, %v228
    %232 = vrot.lane.b32.xlu0 %v230, 64
    %v233 = vpop.permute.xlu0 %232
    %v235 = vadd.f32 %v225, %v233
    %v236 = vtanh.pop %v235
    %238 = vrot.lane.b32.xlu0 %v236, 64
    %v239 = vpop.permute.xlu0 %238
    %v241 = vmul.f32 %v223, %v239
    %v242 = vpack.c.bf16 %v241, %v241
    %v244 = vsel %vm169, %v242, 0
    %246 = vmatprep.subr.bf16.mxu0 0
    %247 = vmatpush1.bf16.msra.mxu0 0
    %248 = vmatprep.subr.bf16.mxu0 0
    %249 = vmatpush1.bf16.msra.mxu0 0
    %250 = vmatprep.subr.bf16.mxu0 0
    %251 = vmatpush1.bf16.msra.mxu0 0
    %252 = vmatprep.subr.bf16.mxu0 0
    %253 = vmatpush1.bf16.msra.mxu0 0
    %254 = vmatprep.subr.bf16.mxu0 %v160
    %255 = vmatpush1.bf16.msra.mxu0 %v159
    %256 = vmatprep.subr.bf16.mxu0 %v158
    %257 = vmatpush1.bf16.msra.mxu0 %v157
    %258 = vmatprep.subr.bf16.mxu0 %v156
    %259 = vmatpush1.bf16.msra.mxu0 %v155
    %260 = vmatprep.subr.bf16.mxu0 %v154
    %261 = vmatpush1.bf16.msra.mxu0 %v153
    %262 = vmatprep.subr.bf16.mxu0 0
    %263 = vmatpush2.bf16.msra.mxu0 0
    %264 = vmatprep.subr.bf16.mxu0 0
    %265 = vmatpush2.bf16.msra.mxu0 0
    %266 = vmatprep.subr.bf16.mxu0 0
    %267 = vmatpush2.bf16.msra.mxu0 0
    %268 = vmatprep.subr.bf16.mxu0 0
    %269 = vmatpush2.bf16.msra.mxu0 0
    %270 = vmatprep.subr.bf16.mxu0 0
    %271 = vmatpush2.bf16.msra.mxu0 0
    %272 = vmatprep.subr.bf16.mxu0 0
    %273 = vmatpush2.bf16.msra.mxu0 0
    %274 = vmatprep.subr.bf16.mxu0 0
    %275 = vmatpush2.bf16.msra.mxu0 0
    %276 = vmatprep.subr.bf16.mxu0 0
    %277 = vmatpush2.bf16.msra.mxu0 0
    %278 = vmatprep.mubr.bf16.mxu0 0
    %279 = vmatmul.mubr.bf16.gmra.mxu0 %v244
    %v280 = vpop.f32.mrf.mxu0
    %v281 = vadd.f32 0.0, %v280
    %v282 = vpop.f32.mrf.mxu0
    %v283 = vadd.f32 0.0, %v282
    %v284 = vpop.f32.mrf.mxu0
    %v285 = vpop.f32.mrf.mxu0
    %286 = vdwg.mxu0
    %v289 = vrot.slane %v281, 7
    %v290 = vrot.slane %v283, 7
    %v293 = vadd.f32 %v115, %v289
    %v294 = vadd.f32 %v117, %v290
    %v295 = vmul.f32 %v293, 0.5
    %v296 = vmul.f32 %v294, 0.5
    %v297 = vtanh.pop %v295
    %v298 = vtanh.pop %v296
    %v299 = vadd.f32 %v297, 1.0
    %v300 = vadd.f32 %v298, 1.0
    %v301 = vmul.f32 %v299, 0.5
    %v302 = vmul.f32 %v300, 0.5
    %v303 = vtanh.pop %v294
    %v305 = vrot.slane %v235, 7
    %v307 = vmul.f32 %v301, %v305
    %309 = vrot.lane.b32.xlu0 %v303, 64
    %v310 = vpop.permute.xlu0 %309
    %v312 = vmul.f32 %v301, %v310
    %314 = vrot.lane.b32.xlu0 %v312, 64
    %v315 = vpop.permute.xlu0 %314
    %v317 = vadd.f32 %v307, %v315
    %v318 = vtanh.pop %v317
    %320 = vrot.lane.b32.xlu0 %v318, 64
    %v321 = vpop.permute.xlu0 %320
    %v323 = vmul.f32 %v302, %v321
    %v324 = vpack.c.bf16 %v323, %v323
    %v326 = vshrl.u32 %v324, 16
    %v329 = vsel %vm169, %v326, 0
    %331 = vmatprep.subr.bf16.mxu0 0
    %332 = vmatpush1.bf16.msra.mxu0 0
    %333 = vmatprep.subr.bf16.mxu0 0
    %334 = vmatpush1.bf16.msra.mxu0 0
    %335 = vmatprep.subr.bf16.mxu0 0
    %336 = vmatpush1.bf16.msra.mxu0 0
    %337 = vmatprep.subr.bf16.mxu0 0
    %338 = vmatpush1.bf16.msra.mxu0 0
    %339 = vmatprep.subr.bf16.mxu0 %v160
    %340 = vmatpush1.bf16.msra.mxu0 %v159
    %341 = vmatprep.subr.bf16.mxu0 %v158
    %342 = vmatpush1.bf16.msra.mxu0 %v157
    %343 = vmatprep.subr.bf16.mxu0 %v156
    %344 = vmatpush1.bf16.msra.mxu0 %v155
    %345 = vmatprep.subr.bf16.mxu0 %v154
    %346 = vmatpush1.bf16.msra.mxu0 %v153
    %347 = vmatprep.subr.bf16.mxu0 0
    %348 = vmatpush2.bf16.msra.mxu0 0
    %349 = vmatprep.subr.bf16.mxu0 0
    %350 = vmatpush2.bf16.msra.mxu0 0
    %351 = vmatprep.subr.bf16.mxu0 0
    %352 = vmatpush2.bf16.msra.mxu0 0
    %353 = vmatprep.subr.bf16.mxu0 0
    %354 = vmatpush2.bf16.msra.mxu0 0
    %355 = vmatprep.subr.bf16.mxu0 0
    %356 = vmatpush2.bf16.msra.mxu0 0
    %357 = vmatprep.subr.bf16.mxu0 0
    %358 = vmatpush2.bf16.msra.mxu0 0
    %359 = vmatprep.subr.bf16.mxu0 0
    %360 = vmatpush2.bf16.msra.mxu0 0
    %361 = vmatprep.subr.bf16.mxu0 0
    %362 = vmatpush2.bf16.msra.mxu0 0
    %363 = vmatprep.mubr.bf16.mxu0 0
    %364 = vmatmul.mubr.bf16.gmra.mxu0 %v329
    %v365 = vpop.f32.mrf.mxu0
    %v366 = vadd.f32 0.0, %v365
    %v367 = vpop.f32.mrf.mxu0
    %v368 = vadd.f32 0.0, %v367
    %v369 = vpop.f32.mrf.mxu0
    %v370 = vpop.f32.mrf.mxu0
    %371 = vdwg.mxu0
    %v374 = vrot.slane %v366, 6
    %v375 = vrot.slane %v368, 6
    %v378 = vadd.f32 %v115, %v374
    %v379 = vadd.f32 %v117, %v375
    %v380 = vmul.f32 %v378, 0.5
    %v381 = vmul.f32 %v379, 0.5
    %v382 = vtanh.pop %v380
    %v383 = vtanh.pop %v381
    %v384 = vadd.f32 %v382, 1.0
    %v385 = vadd.f32 %v383, 1.0
    %v386 = vmul.f32 %v384, 0.5
    %v387 = vmul.f32 %v385, 0.5
    %v388 = vtanh.pop %v379
    %v390 = vrot.slane %v317, 7
    %v392 = vmul.f32 %v386, %v390
    %394 = vrot.lane.b32.xlu0 %v388, 64
    %v395 = vpop.permute.xlu0 %394
    %v397 = vmul.f32 %v386, %v395
    %399 = vrot.lane.b32.xlu0 %v397, 64
    %v400 = vpop.permute.xlu0 %399
    %v402 = vadd.f32 %v392, %v400
    %v403 = vtanh.pop %v402
    %405 = vrot.lane.b32.xlu0 %v403, 64
    %v406 = vpop.permute.xlu0 %405
    %v408 = vmul.f32 %v387, %v406
    %v409 = vpack.c.bf16 %v408, %v408
    %v411 = vrot.slane %v409, 1
    %v413 = vsel %vm169, %v411, 0
    %415 = vmatprep.subr.bf16.mxu0 0
    %416 = vmatpush1.bf16.msra.mxu0 0
    %417 = vmatprep.subr.bf16.mxu0 0
    %418 = vmatpush1.bf16.msra.mxu0 0
    %419 = vmatprep.subr.bf16.mxu0 0
    %420 = vmatpush1.bf16.msra.mxu0 0
    %421 = vmatprep.subr.bf16.mxu0 0
    %422 = vmatpush1.bf16.msra.mxu0 0
    %423 = vmatprep.subr.bf16.mxu0 %v160
    %424 = vmatpush1.bf16.msra.mxu0 %v159
    %425 = vmatprep.subr.bf16.mxu0 %v158
    %426 = vmatpush1.bf16.msra.mxu0 %v157
    %427 = vmatprep.subr.bf16.mxu0 %v156
    %428 = vmatpush1.bf16.msra.mxu0 %v155
    %429 = vmatprep.subr.bf16.mxu0 %v154
    %430 = vmatpush1.bf16.msra.mxu0 %v153
    %431 = vmatprep.subr.bf16.mxu0 0
    %432 = vmatpush2.bf16.msra.mxu0 0
    %433 = vmatprep.subr.bf16.mxu0 0
    %434 = vmatpush2.bf16.msra.mxu0 0
    %435 = vmatprep.subr.bf16.mxu0 0
    %436 = vmatpush2.bf16.msra.mxu0 0
    %437 = vmatprep.subr.bf16.mxu0 0
    %438 = vmatpush2.bf16.msra.mxu0 0
    %439 = vmatprep.subr.bf16.mxu0 0
    %440 = vmatpush2.bf16.msra.mxu0 0
    %441 = vmatprep.subr.bf16.mxu0 0
    %442 = vmatpush2.bf16.msra.mxu0 0
    %443 = vmatprep.subr.bf16.mxu0 0
    %444 = vmatpush2.bf16.msra.mxu0 0
    %445 = vmatprep.subr.bf16.mxu0 0
    %446 = vmatpush2.bf16.msra.mxu0 0
    %447 = vmatprep.mubr.bf16.mxu0 0
    %448 = vmatmul.mubr.bf16.gmra.mxu0 %v413
    %v449 = vpop.f32.mrf.mxu0
    %v450 = vadd.f32 0.0, %v449
    %v451 = vpop.f32.mrf.mxu0
    %v452 = vadd.f32 0.0, %v451
    %v453 = vpop.f32.mrf.mxu0
    %v454 = vpop.f32.mrf.mxu0
    %455 = vdwg.mxu0
    %v458 = vrot.slane %v450, 5
    %v459 = vrot.slane %v452, 5
    %v462 = vadd.f32 %v115, %v458
    %v463 = vadd.f32 %v117, %v459
    %v464 = vmul.f32 %v462, 0.5
    %v465 = vmul.f32 %v463, 0.5
    %v466 = vtanh.pop %v464
    %v467 = vtanh.pop %v465
    %v468 = vadd.f32 %v466, 1.0
    %v469 = vadd.f32 %v467, 1.0
    %v470 = vmul.f32 %v468, 0.5
    %v471 = vmul.f32 %v469, 0.5
    %v472 = vtanh.pop %v463
    %v474 = vrot.slane %v402, 7
    %v476 = vmul.f32 %v470, %v474
    %478 = vrot.lane.b32.xlu0 %v472, 64
    %v479 = vpop.permute.xlu0 %478
    %v481 = vmul.f32 %v470, %v479
    %483 = vrot.lane.b32.xlu0 %v481, 64
    %v484 = vpop.permute.xlu0 %483
    %v486 = vadd.f32 %v476, %v484
    %v487 = vtanh.pop %v486
    %489 = vrot.lane.b32.xlu0 %v487, 64
    %v490 = vpop.permute.xlu0 %489
    %v492 = vmul.f32 %v471, %v490
    %v493 = vpack.c.bf16 %v492, %v492
    %v495 = vshrl.u32 %v493, 16
    %v497 = vrot.slane %v495, 1
    %v499 = vsel %vm169, %v497, 0
    %501 = vmatprep.subr.bf16.mxu0 0
    %502 = vmatpush1.bf16.msra.mxu0 0
    %503 = vmatprep.subr.bf16.mxu0 0
    %504 = vmatpush1.bf16.msra.mxu0 0
    %505 = vmatprep.subr.bf16.mxu0 0
    %506 = vmatpush1.bf16.msra.mxu0 0
    %507 = vmatprep.subr.bf16.mxu0 0
    %508 = vmatpush1.bf16.msra.mxu0 0
    %509 = vmatprep.subr.bf16.mxu0 %v160
    %510 = vmatpush1.bf16.msra.mxu0 %v159
    %511 = vmatprep.subr.bf16.mxu0 %v158
    %512 = vmatpush1.bf16.msra.mxu0 %v157
    %513 = vmatprep.subr.bf16.mxu0 %v156
    %514 = vmatpush1.bf16.msra.mxu0 %v155
    %515 = vmatprep.subr.bf16.mxu0 %v154
    %516 = vmatpush1.bf16.msra.mxu0 %v153
    %517 = vmatprep.subr.bf16.mxu0 0
    %518 = vmatpush2.bf16.msra.mxu0 0
    %519 = vmatprep.subr.bf16.mxu0 0
    %520 = vmatpush2.bf16.msra.mxu0 0
    %521 = vmatprep.subr.bf16.mxu0 0
    %522 = vmatpush2.bf16.msra.mxu0 0
    %523 = vmatprep.subr.bf16.mxu0 0
    %524 = vmatpush2.bf16.msra.mxu0 0
    %525 = vmatprep.subr.bf16.mxu0 0
    %526 = vmatpush2.bf16.msra.mxu0 0
    %527 = vmatprep.subr.bf16.mxu0 0
    %528 = vmatpush2.bf16.msra.mxu0 0
    %529 = vmatprep.subr.bf16.mxu0 0
    %530 = vmatpush2.bf16.msra.mxu0 0
    %531 = vmatprep.subr.bf16.mxu0 0
    %532 = vmatpush2.bf16.msra.mxu0 0
    %533 = vmatprep.mubr.bf16.mxu0 0
    %534 = vmatmul.mubr.bf16.gmra.mxu0 %v499
    %v535 = vpop.f32.mrf.mxu0
    %v536 = vadd.f32 0.0, %v535
    %v537 = vpop.f32.mrf.mxu0
    %v538 = vadd.f32 0.0, %v537
    %v539 = vpop.f32.mrf.mxu0
    %v540 = vpop.f32.mrf.mxu0
    %541 = vdwg.mxu0
    %v544 = vrot.slane %v536, 4
    %v545 = vrot.slane %v538, 4
    %v548 = vadd.f32 %v115, %v544
    %v549 = vadd.f32 %v117, %v545
    %v550 = vmul.f32 %v548, 0.5
    %v551 = vmul.f32 %v549, 0.5
    %v552 = vtanh.pop %v550
    %v553 = vtanh.pop %v551
    %v554 = vadd.f32 %v552, 1.0
    %v555 = vadd.f32 %v553, 1.0
    %v556 = vmul.f32 %v554, 0.5
    %v557 = vmul.f32 %v555, 0.5
    %v558 = vtanh.pop %v549
    %v560 = vrot.slane %v486, 7
    %v562 = vmul.f32 %v556, %v560
    %564 = vrot.lane.b32.xlu0 %v558, 64
    %v565 = vpop.permute.xlu0 %564
    %v567 = vmul.f32 %v556, %v565
    %569 = vrot.lane.b32.xlu0 %v567, 64
    %v570 = vpop.permute.xlu0 %569
    %v572 = vadd.f32 %v562, %v570
    %v573 = vtanh.pop %v572
    %575 = vrot.lane.b32.xlu0 %v573, 64
    %v576 = vpop.permute.xlu0 %575
    %v578 = vmul.f32 %v557, %v576
    %v579 = vpack.c.bf16 %v578, %v578
    %v581 = vrot.slane %v579, 2
    %v583 = vsel %vm169, %v581, 0
    %585 = vmatprep.subr.bf16.mxu0 0
    %586 = vmatpush1.bf16.msra.mxu0 0
    %587 = vmatprep.subr.bf16.mxu0 0
    %588 = vmatpush1.bf16.msra.mxu0 0
    %589 = vmatprep.subr.bf16.mxu0 0
    %590 = vmatpush1.bf16.msra.mxu0 0
    %591 = vmatprep.subr.bf16.mxu0 0
    %592 = vmatpush1.bf16.msra.mxu0 0
    %593 = vmatprep.subr.bf16.mxu0 %v160
    %594 = vmatpush1.bf16.msra.mxu0 %v159
    %595 = vmatprep.subr.bf16.mxu0 %v158
    %596 = vmatpush1.bf16.msra.mxu0 %v157
    %597 = vmatprep.subr.bf16.mxu0 %v156
    %598 = vmatpush1.bf16.msra.mxu0 %v155
    %599 = vmatprep.subr.bf16.mxu0 %v154
    %600 = vmatpush1.bf16.msra.mxu0 %v153
    %601 = vmatprep.subr.bf16.mxu0 0
    %602 = vmatpush2.bf16.msra.mxu0 0
    %603 = vmatprep.subr.bf16.mxu0 0
    %604 = vmatpush2.bf16.msra.mxu0 0
    %605 = vmatprep.subr.bf16.mxu0 0
    %606 = vmatpush2.bf16.msra.mxu0 0
    %607 = vmatprep.subr.bf16.mxu0 0
    %608 = vmatpush2.bf16.msra.mxu0 0
    %609 = vmatprep.subr.bf16.mxu0 0
    %610 = vmatpush2.bf16.msra.mxu0 0
    %611 = vmatprep.subr.bf16.mxu0 0
    %612 = vmatpush2.bf16.msra.mxu0 0
    %613 = vmatprep.subr.bf16.mxu0 0
    %614 = vmatpush2.bf16.msra.mxu0 0
    %615 = vmatprep.subr.bf16.mxu0 0
    %616 = vmatpush2.bf16.msra.mxu0 0
    %617 = vmatprep.mubr.bf16.mxu0 0
    %618 = vmatmul.mubr.bf16.gmra.mxu0 %v583
    %v619 = vpop.f32.mrf.mxu0
    %v620 = vadd.f32 0.0, %v619
    %v621 = vpop.f32.mrf.mxu0
    %v622 = vadd.f32 0.0, %v621
    %v623 = vpop.f32.mrf.mxu0
    %v624 = vpop.f32.mrf.mxu0
    %625 = vdwg.mxu0
    %v628 = vrot.slane %v620, 3
    %v629 = vrot.slane %v622, 3
    %v632 = vadd.f32 %v115, %v628
    %v633 = vadd.f32 %v117, %v629
    %v634 = vmul.f32 %v632, 0.5
    %v635 = vmul.f32 %v633, 0.5
    %v636 = vtanh.pop %v634
    %v637 = vtanh.pop %v635
    %v638 = vadd.f32 %v636, 1.0
    %v639 = vadd.f32 %v637, 1.0
    %v640 = vmul.f32 %v638, 0.5
    %v641 = vmul.f32 %v639, 0.5
    %v642 = vtanh.pop %v633
    %v644 = vrot.slane %v572, 7
    %v646 = vmul.f32 %v640, %v644
    %648 = vrot.lane.b32.xlu0 %v642, 64
    %v649 = vpop.permute.xlu0 %648
    %v651 = vmul.f32 %v640, %v649
    %653 = vrot.lane.b32.xlu0 %v651, 64
    %v654 = vpop.permute.xlu0 %653
    %v656 = vadd.f32 %v646, %v654
    %v657 = vtanh.pop %v656
    %659 = vrot.lane.b32.xlu0 %v657, 64
    %v660 = vpop.permute.xlu0 %659
    %v662 = vmul.f32 %v641, %v660
    %v663 = vpack.c.bf16 %v662, %v662
    %v665 = vshrl.u32 %v663, 16
    %v667 = vrot.slane %v665, 2
    %v669 = vsel %vm169, %v667, 0
    %671 = vmatprep.subr.bf16.mxu0 0
    %672 = vmatpush1.bf16.msra.mxu0 0
    %673 = vmatprep.subr.bf16.mxu0 0
    %674 = vmatpush1.bf16.msra.mxu0 0
    %675 = vmatprep.subr.bf16.mxu0 0
    %676 = vmatpush1.bf16.msra.mxu0 0
    %677 = vmatprep.subr.bf16.mxu0 0
    %678 = vmatpush1.bf16.msra.mxu0 0
    %679 = vmatprep.subr.bf16.mxu0 %v160
    %680 = vmatpush1.bf16.msra.mxu0 %v159
    %681 = vmatprep.subr.bf16.mxu0 %v158
    %682 = vmatpush1.bf16.msra.mxu0 %v157
    %683 = vmatprep.subr.bf16.mxu0 %v156
    %684 = vmatpush1.bf16.msra.mxu0 %v155
    %685 = vmatprep.subr.bf16.mxu0 %v154
    %686 = vmatpush1.bf16.msra.mxu0 %v153
    %687 = vmatprep.subr.bf16.mxu0 0
    %688 = vmatpush2.bf16.msra.mxu0 0
    %689 = vmatprep.subr.bf16.mxu0 0
    %690 = vmatpush2.bf16.msra.mxu0 0
    %691 = vmatprep.subr.bf16.mxu0 0
    %692 = vmatpush2.bf16.msra.mxu0 0
    %693 = vmatprep.subr.bf16.mxu0 0
    %694 = vmatpush2.bf16.msra.mxu0 0
    %695 = vmatprep.subr.bf16.mxu0 0
    %696 = vmatpush2.bf16.msra.mxu0 0
    %697 = vmatprep.subr.bf16.mxu0 0
    %698 = vmatpush2.bf16.msra.mxu0 0
    %699 = vmatprep.subr.bf16.mxu0 0
    %700 = vmatpush2.bf16.msra.mxu0 0
    %701 = vmatprep.subr.bf16.mxu0 0
    %702 = vmatpush2.bf16.msra.mxu0 0
    %703 = vmatprep.mubr.bf16.mxu0 0
    %704 = vmatmul.mubr.bf16.gmra.mxu0 %v669
    %v705 = vpop.f32.mrf.mxu0
    %v706 = vadd.f32 0.0, %v705
    %v707 = vpop.f32.mrf.mxu0
    %v708 = vadd.f32 0.0, %v707
    %v709 = vpop.f32.mrf.mxu0
    %v710 = vpop.f32.mrf.mxu0
    %711 = vdwg.mxu0
    %v714 = vrot.slane %v706, 2
    %v715 = vrot.slane %v708, 2
    %v718 = vadd.f32 %v115, %v714
    %v719 = vadd.f32 %v117, %v715
    %v720 = vmul.f32 %v718, 0.5
    %v721 = vmul.f32 %v719, 0.5
    %v722 = vtanh.pop %v720
    %v723 = vtanh.pop %v721
    %v724 = vadd.f32 %v722, 1.0
    %v725 = vadd.f32 %v723, 1.0
    %v726 = vmul.f32 %v724, 0.5
    %v727 = vmul.f32 %v725, 0.5
    %v728 = vtanh.pop %v719
    %v730 = vrot.slane %v656, 7
    %v732 = vmul.f32 %v726, %v730
    %734 = vrot.lane.b32.xlu0 %v728, 64
    %v735 = vpop.permute.xlu0 %734
    %v737 = vmul.f32 %v726, %v735
    %739 = vrot.lane.b32.xlu0 %v737, 64
    %v740 = vpop.permute.xlu0 %739
    %v742 = vadd.f32 %v732, %v740
    %v743 = vtanh.pop %v742
    %745 = vrot.lane.b32.xlu0 %v743, 64
    %v746 = vpop.permute.xlu0 %745
    %v748 = vmul.f32 %v727, %v746
    %v749 = vpack.c.bf16 %v748, %v748
    %v751 = vrot.slane %v749, 3
    %v753 = vsel %vm169, %v751, 0
    %755 = vmatprep.subr.bf16.mxu0 0
    %756 = vmatpush1.bf16.msra.mxu0 0
    %757 = vmatprep.subr.bf16.mxu0 0
    %758 = vmatpush1.bf16.msra.mxu0 0
    %759 = vmatprep.subr.bf16.mxu0 0
    %760 = vmatpush1.bf16.msra.mxu0 0
    %761 = vmatprep.subr.bf16.mxu0 0
    %762 = vmatpush1.bf16.msra.mxu0 0
    %763 = vmatprep.subr.bf16.mxu0 %v160
    %764 = vmatpush1.bf16.msra.mxu0 %v159
    %765 = vmatprep.subr.bf16.mxu0 %v158
    %766 = vmatpush1.bf16.msra.mxu0 %v157
    %767 = vmatprep.subr.bf16.mxu0 %v156
    %768 = vmatpush1.bf16.msra.mxu0 %v155
    %769 = vmatprep.subr.bf16.mxu0 %v154
    %770 = vmatpush1.bf16.msra.mxu0 %v153
    %771 = vmatprep.subr.bf16.mxu0 0
    %772 = vmatpush2.bf16.msra.mxu0 0
    %773 = vmatprep.subr.bf16.mxu0 0
    %774 = vmatpush2.bf16.msra.mxu0 0
    %775 = vmatprep.subr.bf16.mxu0 0
    %776 = vmatpush2.bf16.msra.mxu0 0
    %777 = vmatprep.subr.bf16.mxu0 0
    %778 = vmatpush2.bf16.msra.mxu0 0
    %779 = vmatprep.subr.bf16.mxu0 0
    %780 = vmatpush2.bf16.msra.mxu0 0
    %781 = vmatprep.subr.bf16.mxu0 0
    %782 = vmatpush2.bf16.msra.mxu0 0
    %783 = vmatprep.subr.bf16.mxu0 0
    %784 = vmatpush2.bf16.msra.mxu0 0
    %785 = vmatprep.subr.bf16.mxu0 0
    %786 = vmatpush2.bf16.msra.mxu0 0
    %787 = vmatprep.mubr.bf16.mxu0 0
    %788 = vmatmul.mubr.bf16.gmra.mxu0 %v753
    %v789 = vpop.f32.mrf.mxu0
    %v790 = vadd.f32 0.0, %v789
    %v791 = vpop.f32.mrf.mxu0
    %v792 = vadd.f32 0.0, %v791
    %v793 = vpop.f32.mrf.mxu0
    %v794 = vpop.f32.mrf.mxu0
    %795 = vdwg.mxu0
    %v798 = vrot.slane %v790, 1
    %v799 = vrot.slane %v792, 1
    %v802 = vadd.f32 %v115, %v798
    %v803 = vadd.f32 %v117, %v799
    %v804 = vmul.f32 %v802, 0.5
    %v805 = vmul.f32 %v803, 0.5
    %v806 = vtanh.pop %v804
    %v807 = vtanh.pop %v805
    %v808 = vadd.f32 %v806, 1.0
    %v809 = vadd.f32 %v807, 1.0
    %v810 = vmul.f32 %v808, 0.5
    %v811 = vmul.f32 %v809, 0.5
    %v812 = vtanh.pop %v803
    %v814 = vrot.slane %v742, 7
    %v816 = vmul.f32 %v810, %v814
    %818 = vrot.lane.b32.xlu0 %v812, 64
    %v819 = vpop.permute.xlu0 %818
    %v821 = vmul.f32 %v810, %v819
    %823 = vrot.lane.b32.xlu0 %v821, 64
    %v824 = vpop.permute.xlu0 %823
    %v826 = vadd.f32 %v816, %v824
    %v827 = vtanh.pop %v826
    %829 = vrot.lane.b32.xlu0 %v827, 64
    %v830 = vpop.permute.xlu0 %829
    %v832 = vmul.f32 %v811, %v830
    %vm833 = vcmask 1040384
    %v834 = vsel %vm833, %v241, %v323
    %vm835 = vcmask 1041408
    %v836 = vsel %vm835, %v834, %v408
    %vm837 = vcmask 1042432
    %v838 = vsel %vm837, %v836, %v492
    %vm839 = vcmask 1043456
    %v840 = vsel %vm839, %v838, %v578
    %vm841 = vcmask 1044480
    %v842 = vsel %vm841, %v840, %v662
    %vm843 = vcmask 1045504
    %v844 = vsel %vm843, %v842, %v748
    %vm845 = vcmask 1046528
    %v846 = vsel %vm845, %v844, %v832
    %v848 = vrot.slane %v832, 7
    %v851 = vrot.slane %v748, 5
    %v854 = vrot.slane %v662, 3
    %v857 = vrot.slane %v578, 1
    %v860 = vrot.slane %v492, 7
    %v863 = vrot.slane %v408, 5
    %v866 = vrot.slane %v323, 3
    %v869 = vrot.slane %v241, 1
    %v871 = vsel %vm833, %v848, %v851
    %v872 = vsel %vm835, %v871, %v854
    %v873 = vsel %vm837, %v872, %v857
    %v874 = vsel %vm839, %v873, %v860
    %v875 = vsel %vm841, %v874, %v863
    %v876 = vsel %vm843, %v875, %v866
    %v877 = vsel %vm845, %v876, %v869
    %v878 = vsel %vm76, %v846, %v877
    %v879 = vpack.c.bf16 %v878, %v878
    %v880 = vld [vmem:[%s4] sm:$0xf]
    %v881 = vld [vmem:[%s4 + $0x4] sm:$0xf]
    %v882 = vld [vmem:[%s4 + $0x8] sm:$0xf]
    %v883 = vld [vmem:[%s4 + $0xc] sm:$0xf]
    %v884 = vld [vmem:[%s4 + $0x10] sm:$0xf]
    %v885 = vld [vmem:[%s4 + $0x14] sm:$0xf]
    %v886 = vld [vmem:[%s4 + $0x18] sm:$0xf]
    %v887 = vld [vmem:[%s4 + $0x1c] sm:$0xf]
    %v888 = vld [vmem:[%s5] sm:$0x1]
    %v890 = vlaneseq
    %v891 = vshrl.u32 %v890, 7
    %v892 = vsub.s32 0, %v891
    %v893 = vrot.slane %v888, %v892
    %v903 = vunpack.c.l.b16 %v880
    %v904 = vunpack.c.l.b16 %v881
    %v905 = vunpack.c.l.b16 %v882
    %v906 = vunpack.c.l.b16 %v883
    %v907 = vunpack.c.l.b16 %v884
    %v908 = vunpack.c.l.b16 %v885
    %v909 = vunpack.c.l.b16 %v886
    %v910 = vunpack.c.l.b16 %v887
    %v911 = vpack.c.b16 %v904, %v903
    %v912 = vpack.c.b16 %v906, %v905
    %v913 = vpack.c.b16 %v908, %v907
    %v914 = vpack.c.b16 %v910, %v909
    %v920 = vsel %vm169, %v879, 0
    %922 = vmatprep.subr.bf16.mxu0 0
    %923 = vmatpush1.bf16.msra.mxu0 0
    %924 = vmatprep.subr.bf16.mxu0 0
    %925 = vmatpush1.bf16.msra.mxu0 0
    %926 = vmatprep.subr.bf16.mxu0 0
    %927 = vmatpush1.bf16.msra.mxu0 0
    %928 = vmatprep.subr.bf16.mxu0 0
    %929 = vmatpush1.bf16.msra.mxu0 0
    %930 = vmatprep.subr.bf16.mxu0 0
    %931 = vmatpush1.bf16.msra.mxu0 %v914
    %932 = vmatprep.subr.bf16.mxu0 0
    %933 = vmatpush1.bf16.msra.mxu0 %v913
    %934 = vmatprep.subr.bf16.mxu0 0
    %935 = vmatpush1.bf16.msra.mxu0 %v912
    %936 = vmatprep.subr.bf16.mxu0 0
    %937 = vmatpush1.bf16.msra.mxu0 %v911
    %938 = vmatprep.subr.bf16.mxu0 0
    %939 = vmatpush2.bf16.msra.mxu0 0
    %940 = vmatprep.subr.bf16.mxu0 0
    %941 = vmatpush2.bf16.msra.mxu0 0
    %942 = vmatprep.subr.bf16.mxu0 0
    %943 = vmatpush2.bf16.msra.mxu0 0
    %944 = vmatprep.subr.bf16.mxu0 0
    %945 = vmatpush2.bf16.msra.mxu0 0
    %946 = vmatprep.subr.bf16.mxu0 0
    %947 = vmatpush2.bf16.msra.mxu0 0
    %948 = vmatprep.subr.bf16.mxu0 0
    %949 = vmatpush2.bf16.msra.mxu0 0
    %950 = vmatprep.subr.bf16.mxu0 0
    %951 = vmatpush2.bf16.msra.mxu0 0
    %952 = vmatprep.subr.bf16.mxu0 0
    %953 = vmatpush2.bf16.msra.mxu0 0
    %954 = vmatprep.mubr.bf16.mxu0 0
    %955 = vmatmul.mubr.bf16.gmra.mxu0 %v920
    %v956 = vpop.f32.mrf.mxu0
    %v957 = vadd.f32 %v893, %v956
    %v958 = vpop.f32.mrf.mxu0
    %v959 = vpop.f32.mrf.mxu0
    %v960 = vpop.f32.mrf.mxu0
    %961 = vdwg.mxu0
    %vm962 = vcmask 64512
    %v963 = vsel %vm962, %v957, -inf
    %964 = vmax.xlane.f32.xlu0 %v963
    %v965 = vpop.xlane.xlu0 %964
    %v966 = vsub.f32 %v957, %v965
    %v967 = vmul.f32 %v966, 1.442695
    %v968 = vpow.pop %v967
    %v969 = vsel %vm962, %v968, 0.0
    %970 = vadd.xlane.f32.xlu0 %v969
    %v971 = vpop.xlane.xlu0 %970
    %v972 = vlog2.pop %v971
    %v973 = vmul.f32 %v972, 0.6931472
    %v974 = vsub.f32 %v966, %v973
    %975 = vst.msk [vmem:[#allocation5] sm:$0xff] %vm962, %v974
    // Predicated region
    $region30: #{tpu_custom_call.1} parent=1 // pred_check
      _
    $region31: #{tpu_custom_call.1} parent=1 // pred_check_branch
      %977 = sbr.rel (0) target = $region33
    $region32: #{tpu_custom_call.1} parent=1 // pred_region
      %s979 = ssub.s32 128, 128
      %980 = vsyncadd [#allocation4], %s979
      %s982 = sshll.u32 [#allocation5], 4
      %s983 = int_to_ptr.vmem [resolvable:$true] %s982
      %985 = dma.vmem_to_hbm [thread:$0]  %s983, 128, %s6, [#allocation4]
    $region33: #{tpu_custom_call.1} parent=1 // pred_fallthru
      _
    // Predicated region
    $region34: #{tpu_custom_call.1} parent=1 // pred_check
      _
    $region35: #{tpu_custom_call.1} parent=1 // pred_check_branch
      %987 = sbr.rel (0) target = $region37
    $region36: #{tpu_custom_call.1} parent=1 // pred_region
      %988 = dma.done [#allocation4], 128
    $region37: #{tpu_custom_call.1} parent=1 // pred_fallthru
      _
    %989 = vsyncpa [#allocation3], 1
    %990 = vsyncpa [#allocation4], 1

</llo_original>
